<compile_context>
chip_gen: v7x
topology: tpu7x:2x2x1
jax: 0.10.0
libtpu: 0.0.40
codegen_flags: <defaults>
</compile_context>

<pallas_src>
import functools
import math

import jax
import jax.numpy as jnp
from jax.experimental import pallas as pl
from jax.experimental.pallas import tpu as pltpu

EMB_DIM = 32          # sinusoidal embedding dim E
FEATURE_DIM = 8       # number of time-series features D
EPS = 1e-6
PACK = 4              # batch rows packed per 128-lane row
LANES = PACK * EMB_DIM  # 128


# ---------------------------------------------------------------------------
# Kernel
# ---------------------------------------------------------------------------
def stat_predictor_kernel(x_ref, p_ref, out_ref):
    """Forward pass for one lane-packed batch tile, entirely in VMEM.

    x_ref   : (TB4, 8)  f32   row r = [si_0, sl_0, si_1, sl_1, si_2, sl_2, si_3, sl_3]
                              (the 4 batch rows packed into this lane row)
    p_ref   : (5*128 + 16, 128) f32 packed parameter slab
                rows 0:128     block-diag W_sin   rows 128:256  block-diag W_cos
                rows 256:384   block-diag W2      rows 384:512  block-diag W3
                rows 512:640   block-diag W4 (padded)
                rows 640:648   b1, b2, b3, b4(padded), sigma-mask, 3 zero rows
                rows 648:656   S  (8, 128) input->embedding-args expansion matrix
    out_ref : (TB4, 128) f32  each 32-lane block: [mu(8) | softplus(sigma)+eps(8) | pad(16)]
    """
    L = p_ref.shape[-1]                      # 128

    w_sin = p_ref[0 * L:1 * L, :]
    w_cos = p_ref[1 * L:2 * L, :]
    w2 = p_ref[2 * L:3 * L, :]
    w3 = p_ref[3 * L:4 * L, :]
    w4 = p_ref[4 * L:5 * L, :]
    tail = p_ref[5 * L:5 * L + 8, :]         # 8-row aligned bias/mask block
    b1 = tail[0:1, :]
    b2 = tail[1:2, :]
    b3 = tail[2:3, :]
    b4 = tail[3:4, :]
    sig_mask = tail[4:5, :]
    s_expand = p_ref[5 * L + 8:5 * L + 16, :]   # (8, 128)

    # Sinusoidal-embedding arguments for all 4 packed rows via one small MXU
    # matmul; per 32-lane block: [si*freqs (16) | sl*freqs (16)].
    args = jnp.dot(x_ref[...], s_expand, preferred_element_type=jnp.float32)

    # cond_mlp linear 1 split into sin / cos row groups (no lane concat)
    h = (jnp.dot(jnp.sin(args), w_sin, preferred_element_type=jnp.float32)
         + jnp.dot(jnp.cos(args), w_cos, preferred_element_type=jnp.float32)
         + b1)
    h = h * jax.nn.sigmoid(h)                                      # SiLU
    h = jnp.dot(h, w2, preferred_element_type=jnp.float32) + b2

    # stat_mlp
    h = jnp.dot(h, w3, preferred_element_type=jnp.float32) + b3
    h = h * jax.nn.sigmoid(h)                                      # SiLU
    h = jnp.dot(h, w4, preferred_element_type=jnp.float32) + b4    # (TB4, 128)

    # Softplus only on the sigma lanes (mask row precomputed in the slab).
    softplus = jnp.maximum(h, 0.0) + jnp.log1p(jnp.exp(-jnp.abs(h))) + EPS
    out_ref[...] = jnp.where(sig_mask > 0.5, softplus, h)


# ---------------------------------------------------------------------------
# Parameter construction (PyTorch-style init) and one-time packing
# ---------------------------------------------------------------------------
def init_params(key, emb_dim=EMB_DIM, feature_dim=FEATURE_DIM):
    """Synthetic parameters (PyTorch-style uniform +-1/sqrt(fan_in)).

    Weights are stored (in_features, out_features) so y = x @ W + b.
    """
    def linear(k, fan_in, fan_out):
        kw, kb = jax.random.split(k)
        bound = 1.0 / math.sqrt(fan_in)
        w = jax.random.uniform(kw, (fan_in, fan_out), jnp.float32, -bound, bound)
        b = jax.random.uniform(kb, (1, fan_out), jnp.float32, -bound, bound)
        return w, b

    k1, k2, k3, k4 = jax.random.split(key, 4)
    w1, b1 = linear(k1, 2 * emb_dim, emb_dim)
    w2, b2 = linear(k2, emb_dim, emb_dim)
    w3, b3 = linear(k3, emb_dim, emb_dim)
    w4, b4 = linear(k4, emb_dim, 2 * feature_dim)
    return dict(w1=w1, b1=b1, w2=w2, b2=b2, w3=w3, b3=b3, w4=w4, b4=b4)


def pack_params(params, emb_dim=EMB_DIM, feature_dim=FEATURE_DIM):
    """Pack everything into one (5*128 + 16, 128) f32 slab.  Call ONCE at init
    (hoisted out of the forward path)."""
    E, D = emb_dim, feature_dim
    half = E // 2
    L = PACK * E
    assert E % 8 == 0 and 2 * D <= E, "packing assumes E % 8 == 0 and 2D <= E"

    w1, w2, w3, w4 = params["w1"], params["w2"], params["w3"], params["w4"]
    b1, b2, b3, b4 = params["b1"], params["b2"], params["b3"], params["b4"]

    # Regroup cond_mlp's first linear rows by (sin, cos) input halves.
    # Original input layout: [sin(si f), cos(si f), sin(sl f), cos(sl f)].
    w_sin = jnp.concatenate([w1[0:half], w1[2 * half:3 * half]], axis=0)       # (E, E)
    w_cos = jnp.concatenate([w1[half:2 * half], w1[3 * half:4 * half]], axis=0)

    w4p = jnp.zeros((E, E), jnp.float32).at[:, :2 * D].set(w4)
    b4p = jnp.zeros((1, E), jnp.float32).at[:, :2 * D].set(b4)

    eye = jnp.eye(PACK, dtype=jnp.float32)
    bd = lambda w: jnp.kron(eye, w)            # block-diag, 4 copies -> (L, L)
    tile = lambda b: jnp.tile(b, (1, PACK))    # (1, L)

    # Sigma-column mask: within each E-lane block, cols D:2D are sigma lanes.
    col = jnp.arange(L) % E
    sig_mask = ((col >= D) & (col < 2 * D)).astype(jnp.float32)[None, :]

    # Input expansion matrix:  (TB4, 8) @ S -> (TB4, 128) embedding arguments.
    freqs = jnp.exp(-math.log(10000.0) * jnp.arange(half, dtype=jnp.float32) / half)
    s = jnp.zeros((2 * PACK, L), jnp.float32)
    for j in range(PACK):
        s = s.at[2 * j, j * E: j * E + half].set(freqs)              # si_j -> first half
        s = s.at[2 * j + 1, j * E + half: (j + 1) * E].set(freqs)    # sl_j -> second half

    slab = jnp.concatenate(
        [bd(w_sin), bd(w_cos), bd(w2), bd(w3), bd(w4p),
         tile(b1), tile(b2), tile(b3), tile(b4p), sig_mask,
         jnp.zeros((3, L), jnp.float32),       # pad bias block to 8 rows
         s],
        axis=0)
    assert slab.shape == (5 * L + 16, L)
    return slab


# ---------------------------------------------------------------------------
# Tiling
# ---------------------------------------------------------------------------
def _choose_block_rows(b4, max_block_rows=1024):
    """Packed rows per block: the biggest block up to max_block_rows, but at
    least 2 grid steps once the batch is non-trivial so v7x can shard the
    'parallel' grid axis across both TensorCores (no-op on v5e/v6e)."""
    if b4 <= 8:
        return max(b4, 1)
    half = pl.cdiv(b4, 2)
    tb4 = max(8, (half // 8) * 8)
    return min(max_block_rows, tb4)


# ---------------------------------------------------------------------------
# Wrapper (slab is pre-packed; forward path is just pad/reshape + pallas_call)
# ---------------------------------------------------------------------------
@functools.partial(jax.jit,
                   static_argnames=("emb_dim", "feature_dim", "max_block_rows"))
def stat_predictor(start_idx, series_len, slab, *,
                   emb_dim=EMB_DIM, feature_dim=FEATURE_DIM, max_block_rows=1024):
    B = start_idx.shape[0]
    E, D = emb_dim, feature_dim
    L = PACK * E

    b4 = pl.cdiv(B, PACK)
    tb4 = _choose_block_rows(b4, max_block_rows)
    n_blocks = pl.cdiv(b4, tb4)
    b4_pad = n_blocks * tb4
    b_pad = b4_pad * PACK

    x = jnp.stack([start_idx.astype(jnp.float32),
                   series_len.astype(jnp.float32)], axis=-1)       # (B, 2)
    if b_pad != B:
        x = jnp.pad(x, ((0, b_pad - B), (0, 0)))
    x = x.reshape(b4_pad, 2 * PACK)                                # (B/4, 8)

    out = pl.pallas_call(
        stat_predictor_kernel,
        out_shape=jax.ShapeDtypeStruct((b4_pad, L), jnp.float32),
        grid=(n_blocks,),
        in_specs=[
            pl.BlockSpec((tb4, 2 * PACK), lambda i: (i, 0)),   # packed positional input
            # Constant index map -> slab fetched once and stays VMEM-resident.
            pl.BlockSpec(slab.shape, lambda i: (0, 0)),
        ],
        out_specs=pl.BlockSpec((tb4, L), lambda i: (i, 0)),    # lane-dense (., 128) slab
        compiler_params=pltpu.CompilerParams(
            dimension_semantics=("parallel",)),                # megacore on v7x
    )(x, slab)

    out = out.reshape(b_pad, E)[:B]       # row-major unpack of the 4x lane packing
    mu = out[:, :D]
    sigma = out[:, D:2 * D]
    return mu, sigma


# ---------------------------------------------------------------------------
# Pure-JAX reference (mirrors the PyTorch module)
# ---------------------------------------------------------------------------
def _reference(start_idx, series_len, params,
               emb_dim=EMB_DIM, feature_dim=FEATURE_DIM):
    half = emb_dim // 2
    freqs = jnp.exp(-math.log(10000.0) * jnp.arange(half, dtype=jnp.float32) / half)

    def emb(t):
        a = t.astype(jnp.float32)[:, None] * freqs[None, :]
        return jnp.concatenate([jnp.sin(a), jnp.cos(a)], axis=-1)

    x = jnp.concatenate([emb(start_idx), emb(series_len)], axis=-1)
    h = x @ params["w1"] + params["b1"]
    h = h * jax.nn.sigmoid(h)
    h = h @ params["w2"] + params["b2"]
    h = h @ params["w3"] + params["b3"]
    h = h * jax.nn.sigmoid(h)
    h = h @ params["w4"] + params["b4"]
    mu = h[:, :feature_dim]
    sigma = jax.nn.softplus(h[:, feature_dim:]) + EPS
    return mu, sigma


if __name__ == "__main__":
    key = jax.random.PRNGKey(0)
    kp, ki, kl = jax.random.split(key, 3)

    params = init_params(kp)
    slab = pack_params(params)            # packed ONCE, outside the hot path

    # --- primary small test (single-block grid) ---
    B = 8
    start_idx = jax.random.randint(ki, (B,), 0, 1000, dtype=jnp.int32)
    series_len = jax.random.randint(kl, (B,), 100, 5000, dtype=jnp.int32)

    mu, sigma = stat_predictor(start_idx, series_len, slab)
    jax.block_until_ready((mu, sigma))

    mu_ref, sigma_ref = _reference(start_idx, series_len, params)
    assert mu.shape == (B, FEATURE_DIM) and sigma.shape == (B, FEATURE_DIM)
    assert jnp.allclose(mu, mu_ref, atol=1e-4, rtol=1e-4)
    assert jnp.allclose(sigma, sigma_ref, atol=1e-4, rtol=1e-4)
    assert bool(jnp.all(sigma > 0))

    # --- padding path (batch not divisible by the 4x lane packing) ---
    B1 = 10
    ki1, kl1 = jax.random.split(jax.random.PRNGKey(2))
    si1 = jax.random.randint(ki1, (B1,), 0, 1000, dtype=jnp.int32)
    sl1 = jax.random.randint(kl1, (B1,), 100, 5000, dtype=jnp.int32)
    mu1, sigma1 = stat_predictor(si1, sl1, slab)
    jax.block_until_ready((mu1, sigma1))
    mu1_ref, sigma1_ref = _reference(si1, sl1, params)
    assert mu1.shape == (B1, FEATURE_DIM)
    assert jnp.allclose(mu1, mu1_ref, atol=1e-4, rtol=1e-4)
    assert jnp.allclose(sigma1, sigma1_ref, atol=1e-4, rtol=1e-4)

    # --- multi-block batch grid / megacore path ---
    B2 = 2048
    ki2, kl2 = jax.random.split(jax.random.PRNGKey(1))
    si2 = jax.random.randint(ki2, (B2,), 0, 1000, dtype=jnp.int32)
    sl2 = jax.random.randint(kl2, (B2,), 100, 5000, dtype=jnp.int32)

    mu2, sigma2 = stat_predictor(si2, sl2, slab)
    jax.block_until_ready((mu2, sigma2))

    mu2_ref, sigma2_ref = _reference(si2, sl2, params)
    assert jnp.allclose(mu2, mu2_ref, atol=1e-4, rtol=1e-4)
    assert jnp.allclose(sigma2, sigma2_ref, atol=1e-4, rtol=1e-4)
    assert bool(jnp.all(sigma2 > 0))

    print("KERNEL_OK")
</pallas_src>

<mosaic_0001>
module attributes {stable_mosaic.version = 11 : i64} {
  func.func @stat_predictor_kernel(%arg0: i32, %arg1: memref<2x8xf32, #tpu.memory_space<vmem>>, %arg2: memref<656x128xf32, #tpu.memory_space<vmem>>, %arg3: memref<2x128xf32, #tpu.memory_space<vmem>>) attributes {dimension_semantics = [#tpu.dimension_semantics<parallel>], iteration_bounds = array<i64: 1>, scalar_prefetch = 0 : i64, scratch_operands = 0 : i64, tpu.core_type = #tpu.core_type<tc>, window_params = [{transform_indices = @transform_0, window_bounds = array<i64: 2, 8>}, {pipeline_mode = #tpu.pipeline_mode<synchronous>, transform_indices = @transform_1, window_bounds = array<i64: 656, 128>}, {transform_indices = @transform_2, window_bounds = array<i64: 2, 128>}]} {
    %c0 = arith.constant 0 : index
    %c0_0 = arith.constant 0 : index
    %0 = vector.load %arg2[%c0, %c0_0] : memref<656x128xf32, #tpu.memory_space<vmem>>, vector<128x128xf32>
    %c128 = arith.constant 128 : index
    %c0_1 = arith.constant 0 : index
    %1 = vector.load %arg2[%c128, %c0_1] : memref<656x128xf32, #tpu.memory_space<vmem>>, vector<128x128xf32>
    %c256 = arith.constant 256 : index
    %c0_2 = arith.constant 0 : index
    %2 = vector.load %arg2[%c256, %c0_2] : memref<656x128xf32, #tpu.memory_space<vmem>>, vector<128x128xf32>
    %c384 = arith.constant 384 : index
    %c0_3 = arith.constant 0 : index
    %3 = vector.load %arg2[%c384, %c0_3] : memref<656x128xf32, #tpu.memory_space<vmem>>, vector<128x128xf32>
    %c512 = arith.constant 512 : index
    %c0_4 = arith.constant 0 : index
    %4 = vector.load %arg2[%c512, %c0_4] : memref<656x128xf32, #tpu.memory_space<vmem>>, vector<128x128xf32>
    %c640 = arith.constant 640 : index
    %c0_5 = arith.constant 0 : index
    %5 = vector.load %arg2[%c640, %c0_5] : memref<656x128xf32, #tpu.memory_space<vmem>>, vector<8x128xf32>
    %6 = vector.extract_strided_slice %5 {offsets = [0, 0], sizes = [1, 128], strides = [1, 1]} : vector<8x128xf32> to vector<1x128xf32>
    %7 = vector.extract_strided_slice %5 {offsets = [1, 0], sizes = [1, 128], strides = [1, 1]} : vector<8x128xf32> to vector<1x128xf32>
    %8 = vector.extract_strided_slice %5 {offsets = [2, 0], sizes = [1, 128], strides = [1, 1]} : vector<8x128xf32> to vector<1x128xf32>
    %9 = vector.extract_strided_slice %5 {offsets = [3, 0], sizes = [1, 128], strides = [1, 1]} : vector<8x128xf32> to vector<1x128xf32>
    %10 = vector.extract_strided_slice %5 {offsets = [4, 0], sizes = [1, 128], strides = [1, 1]} : vector<8x128xf32> to vector<1x128xf32>
    %c648 = arith.constant 648 : index
    %c0_6 = arith.constant 0 : index
    %11 = vector.load %arg2[%c648, %c0_6] : memref<656x128xf32, #tpu.memory_space<vmem>>, vector<8x128xf32>
    %c0_7 = arith.constant 0 : index
    %c0_8 = arith.constant 0 : index
    %12 = vector.load %arg1[%c0_7, %c0_8] : memref<2x8xf32, #tpu.memory_space<vmem>>, vector<2x8xf32>
    %cst = arith.constant dense<0.000000e+00> : vector<2x128xf32>
    %13 = tpu.matmul %12, %11, %cst {dimension_numbers = #tpu.dot_dimension_numbers<[1], [0], [0], [1], [0, 0, 1, 1], [], []>} : vector<2x8xf32>, vector<8x128xf32>, vector<2x128xf32> -> vector<2x128xf32>
    %14 = math.sin %13 : vector<2x128xf32>
    %cst_9 = arith.constant dense<0.000000e+00> : vector<2x128xf32>
    %15 = tpu.matmul %14, %0, %cst_9 {dimension_numbers = #tpu.dot_dimension_numbers<[1], [0], [0], [1], [0, 0, 1, 1], [], []>} : vector<2x128xf32>, vector<128x128xf32>, vector<2x128xf32> -> vector<2x128xf32>
    %16 = math.cos %13 : vector<2x128xf32>
    %cst_10 = arith.constant dense<0.000000e+00> : vector<2x128xf32>
    %17 = tpu.matmul %16, %1, %cst_10 {dimension_numbers = #tpu.dot_dimension_numbers<[1], [0], [0], [1], [0, 0, 1, 1], [], []>} : vector<2x128xf32>, vector<128x128xf32>, vector<2x128xf32> -> vector<2x128xf32>
    %18 = arith.addf %15, %17 : vector<2x128xf32>
    %19 = vector.broadcast %6 : vector<1x128xf32> to vector<2x128xf32>
    %20 = arith.addf %18, %19 : vector<2x128xf32>
    %21 = arith.negf %20 : vector<2x128xf32>
    %22 = math.exp %21 : vector<2x128xf32>
    %cst_11 = arith.constant 1.000000e+00 : f32
    %23 = vector.broadcast %cst_11 : f32 to vector<2x128xf32>
    %24 = arith.addf %23, %22 : vector<2x128xf32>
    %25 = arith.divf %23, %24 : vector<2x128xf32>
    %26 = arith.mulf %20, %25 : vector<2x128xf32>
    %cst_12 = arith.constant dense<0.000000e+00> : vector<2x128xf32>
    %27 = tpu.matmul %26, %2, %cst_12 {dimension_numbers = #tpu.dot_dimension_numbers<[1], [0], [0], [1], [0, 0, 1, 1], [], []>} : vector<2x128xf32>, vector<128x128xf32>, vector<2x128xf32> -> vector<2x128xf32>
    %28 = vector.broadcast %7 : vector<1x128xf32> to vector<2x128xf32>
    %29 = arith.addf %27, %28 : vector<2x128xf32>
    %cst_13 = arith.constant dense<0.000000e+00> : vector<2x128xf32>
    %30 = tpu.matmul %29, %3, %cst_13 {dimension_numbers = #tpu.dot_dimension_numbers<[1], [0], [0], [1], [0, 0, 1, 1], [], []>} : vector<2x128xf32>, vector<128x128xf32>, vector<2x128xf32> -> vector<2x128xf32>
    %31 = vector.broadcast %8 : vector<1x128xf32> to vector<2x128xf32>
    %32 = arith.addf %30, %31 : vector<2x128xf32>
    %33 = arith.negf %32 : vector<2x128xf32>
    %34 = math.exp %33 : vector<2x128xf32>
    %cst_14 = arith.constant 1.000000e+00 : f32
    %35 = vector.broadcast %cst_14 : f32 to vector<2x128xf32>
    %36 = arith.addf %35, %34 : vector<2x128xf32>
    %37 = arith.divf %35, %36 : vector<2x128xf32>
    %38 = arith.mulf %32, %37 : vector<2x128xf32>
    %cst_15 = arith.constant dense<0.000000e+00> : vector<2x128xf32>
    %39 = tpu.matmul %38, %4, %cst_15 {dimension_numbers = #tpu.dot_dimension_numbers<[1], [0], [0], [1], [0, 0, 1, 1], [], []>} : vector<2x128xf32>, vector<128x128xf32>, vector<2x128xf32> -> vector<2x128xf32>
    %40 = vector.broadcast %9 : vector<1x128xf32> to vector<2x128xf32>
    %41 = arith.addf %39, %40 : vector<2x128xf32>
    %cst_16 = arith.constant 0.000000e+00 : f32
    %42 = vector.broadcast %cst_16 : f32 to vector<2x128xf32>
    %43 = arith.maximumf %41, %42 : vector<2x128xf32>
    %44 = math.absf %41 : vector<2x128xf32>
    %cst_17 = arith.constant 0.000000e+00 : f32
    %45 = vector.broadcast %cst_17 : f32 to vector<2x128xf32>
    %46 = arith.subf %45, %44 : vector<2x128xf32>
    %47 = math.exp %46 : vector<2x128xf32>
    %48 = math.log1p %47 : vector<2x128xf32>
    %49 = arith.addf %43, %48 : vector<2x128xf32>
    %cst_18 = arith.constant 9.99999997E-7 : f32
    %50 = vector.broadcast %cst_18 : f32 to vector<2x128xf32>
    %51 = arith.addf %49, %50 : vector<2x128xf32>
    %cst_19 = arith.constant 5.000000e-01 : f32
    %52 = vector.broadcast %cst_19 : f32 to vector<1x128xf32>
    %53 = arith.cmpf ogt, %10, %52 : vector<1x128xf32>
    %54 = vector.shape_cast %53 : vector<1x128xi1> to vector<1x128xi1>
    %55 = vector.broadcast %54 : vector<1x128xi1> to vector<2x128xi1>
    %56 = arith.select %55, %51, %41 : vector<2x128xi1>, vector<2x128xf32>
    %c0_20 = arith.constant 0 : index
    %c0_21 = arith.constant 0 : index
    %57 = vector.load %arg3[%c0_20, %c0_21] : memref<2x128xf32, #tpu.memory_space<vmem>>, vector<2x128xf32>
    tpu.vector_store %arg3[%c0_20, %c0_21], %56 {strides = array<i32>} : memref<2x128xf32, #tpu.memory_space<vmem>>, vector<2x128xf32>,
    return
  }
  func.func @transform_0(%arg0: i32) -> (i32, i32) {
    %c0_i32 = arith.constant 0 : i32
    %c0_i32_0 = arith.constant 0 : i32
    return %arg0, %c0_i32 : i32, i32
  }
  func.func @transform_1(%arg0: i32) -> (i32, i32) {
    %c0_i32 = arith.constant 0 : i32
    %c0_i32_0 = arith.constant 0 : i32
    %c0_i32_1 = arith.constant 0 : i32
    return %c0_i32, %c0_i32_0 : i32, i32
  }
  func.func @transform_2(%arg0: i32) -> (i32, i32) {
    %c0_i32 = arith.constant 0 : i32
    %c0_i32_0 = arith.constant 0 : i32
    return %arg0, %c0_i32 : i32, i32
  }
}

</mosaic_0001>

<llo_original>
// kernel: stat_predictor.1
$region0: #{stat_predictor.1}
  #allocation0 [shape = 'u32[]', space=smem, size = 0x4, offset = 0x4, fixed_abs, tag = 'smem constant byte address 0x4 - core index']
  #allocation1 [shape = 'u32[144,128]{1,0:T(1,128)}', space=vmem, size = 0x12000, scoped, tag = 'internal scratch']
  %s0 = inlined_call_operand.vmem [shape: f32[2,8], index: 0, kind: input, shape index: {}]
  %s1 = inlined_call_operand.hbm [shape: f32[656,128], index: 1, kind: input, shape index: {}]
  %s2 = inlined_call_operand.vmem [shape: f32[2,128], index: 2, kind: output, shape index: {}]
  %s3 = sld [smem:[#allocation0]]
  $region22: #{stat_predictor.1} parent=0
    _
  %s5 = ssub.s32 1, %s3
  %s6 = scalar_select 0, %s5, %s3
  $region1: #{stat_predictor.1} parent=0
    #allocation2 [shape = 'u8[335872]{0}', space=vmem, size = 0x52000, scoped, tag = 'input window, operand 1, single buffered']
    #allocation3 [shape = 's32[1]{0}', space=sflag, size = 0x4, scoped, tag = 'scoped memory for stat_predictor.1']
    %7 = vsyncpa [#allocation3], 0
    // Predicated region
    $region2: #{stat_predictor.1} parent=1 // pred_check
      _
    $region3: #{stat_predictor.1} parent=1 // pred_check_branch
      %9 = sbr.rel (0) target = $region5
    $region4: #{stat_predictor.1} parent=1 // pred_region
      _
    $region5: #{stat_predictor.1} parent=1 // pred_fallthru
      _
    // Predicated region
    $region6: #{stat_predictor.1} parent=1 // pred_check
      _
    $region7: #{stat_predictor.1} parent=1 // pred_check_branch
      %11 = sbr.rel (0) target = $region9
    $region8: #{stat_predictor.1} parent=1 // pred_region
      %s13 = ssub.s32 10496, 10496
      %14 = vsyncadd [#allocation3], %s13
      %s15 = sshll.u32 [#allocation2], 4
      %s16 = int_to_ptr.vmem [resolvable:$true] %s15
      %21 = dma.hbm_to_vmem [thread:$0]  %s1, 10496, %s16, [#allocation3], 128, 128, 8
    $region9: #{stat_predictor.1} parent=1 // pred_fallthru
      _
    // Predicated region
    $region10: #{stat_predictor.1} parent=1 // pred_check
      _
    $region11: #{stat_predictor.1} parent=1 // pred_check_branch
      %23 = sbr.rel (0) target = $region13
    $region12: #{stat_predictor.1} parent=1 // pred_region
      %24 = dma.done [#allocation3], 10496
    $region13: #{stat_predictor.1} parent=1 // pred_fallthru
      _
    %v25 = vld [vmem:[#allocation2] sm:$0xff]
    %v26 = vld [vmem:[#allocation2 + $0x8] sm:$0xff]
    %v27 = vld [vmem:[#allocation2 + $0x10] sm:$0xff]
    %v28 = vld [vmem:[#allocation2 + $0x18] sm:$0xff]
    %v29 = vld [vmem:[#allocation2 + $0x20] sm:$0xff]
    %v30 = vld [vmem:[#allocation2 + $0x28] sm:$0xff]
    %v31 = vld [vmem:[#allocation2 + $0x30] sm:$0xff]
    %v32 = vld [vmem:[#allocation2 + $0x38] sm:$0xff]
    %v33 = vld [vmem:[#allocation2 + $0x40] sm:$0xff]
    %v34 = vld [vmem:[#allocation2 + $0x48] sm:$0xff]
    %v35 = vld [vmem:[#allocation2 + $0x50] sm:$0xff]
    %v36 = vld [vmem:[#allocation2 + $0x58] sm:$0xff]
    %v37 = vld [vmem:[#allocation2 + $0x60] sm:$0xff]
    %v38 = vld [vmem:[#allocation2 + $0x68] sm:$0xff]
    %v39 = vld [vmem:[#allocation2 + $0x70] sm:$0xff]
    %v40 = vld [vmem:[#allocation2 + $0x78] sm:$0xff]
    %v41 = vld [vmem:[#allocation2 + $0x80] sm:$0xff]
    %v42 = vld [vmem:[#allocation2 + $0x88] sm:$0xff]
    %v43 = vld [vmem:[#allocation2 + $0x90] sm:$0xff]
    %v44 = vld [vmem:[#allocation2 + $0x98] sm:$0xff]
    %v45 = vld [vmem:[#allocation2 + $0xa0] sm:$0xff]
    %v46 = vld [vmem:[#allocation2 + $0xa8] sm:$0xff]
    %v47 = vld [vmem:[#allocation2 + $0xb0] sm:$0xff]
    %v48 = vld [vmem:[#allocation2 + $0xb8] sm:$0xff]
    %v49 = vld [vmem:[#allocation2 + $0xc0] sm:$0xff]
    %v50 = vld [vmem:[#allocation2 + $0xc8] sm:$0xff]
    %v51 = vld [vmem:[#allocation2 + $0xd0] sm:$0xff]
    %v52 = vld [vmem:[#allocation2 + $0xd8] sm:$0xff]
    %v53 = vld [vmem:[#allocation2 + $0xe0] sm:$0xff]
    %v54 = vld [vmem:[#allocation2 + $0xe8] sm:$0xff]
    %v55 = vld [vmem:[#allocation2 + $0xf0] sm:$0xff]
    %v56 = vld [vmem:[#allocation2 + $0xf8] sm:$0xff]
    %v57 = vld [vmem:[#allocation2 + $0x100] sm:$0xff]
    %v58 = vld [vmem:[#allocation2 + $0x108] sm:$0xff]
    %v59 = vld [vmem:[#allocation2 + $0x110] sm:$0xff]
    %v60 = vld [vmem:[#allocation2 + $0x118] sm:$0xff]
    %v61 = vld [vmem:[#allocation2 + $0x120] sm:$0xff]
    %v62 = vld [vmem:[#allocation2 + $0x128] sm:$0xff]
    %v63 = vld [vmem:[#allocation2 + $0x130] sm:$0xff]
    %v64 = vld [vmem:[#allocation2 + $0x138] sm:$0xff]
    %v65 = vld [vmem:[#allocation2 + $0x140] sm:$0xff]
    %v66 = vld [vmem:[#allocation2 + $0x148] sm:$0xff]
    %v67 = vld [vmem:[#allocation2 + $0x150] sm:$0xff]
    %v68 = vld [vmem:[#allocation2 + $0x158] sm:$0xff]
    %v69 = vld [vmem:[#allocation2 + $0x160] sm:$0xff]
    %v70 = vld [vmem:[#allocation2 + $0x168] sm:$0xff]
    %v71 = vld [vmem:[#allocation2 + $0x170] sm:$0xff]
    %v72 = vld [vmem:[#allocation2 + $0x178] sm:$0xff]
    %v73 = vld [vmem:[#allocation2 + $0x180] sm:$0xff]
    %v74 = vld [vmem:[#allocation2 + $0x188] sm:$0xff]
    %v75 = vld [vmem:[#allocation2 + $0x190] sm:$0xff]
    %v76 = vld [vmem:[#allocation2 + $0x198] sm:$0xff]
    %v77 = vld [vmem:[#allocation2 + $0x1a0] sm:$0xff]
    %v78 = vld [vmem:[#allocation2 + $0x1a8] sm:$0xff]
    %v79 = vld [vmem:[#allocation2 + $0x1b0] sm:$0xff]
    %v80 = vld [vmem:[#allocation2 + $0x1b8] sm:$0xff]
    %v81 = vld [vmem:[#allocation2 + $0x1c0] sm:$0xff]
    %v82 = vld [vmem:[#allocation2 + $0x1c8] sm:$0xff]
    %v83 = vld [vmem:[#allocation2 + $0x1d0] sm:$0xff]
    %v84 = vld [vmem:[#allocation2 + $0x1d8] sm:$0xff]
    %v85 = vld [vmem:[#allocation2 + $0x1e0] sm:$0xff]
    %v86 = vld [vmem:[#allocation2 + $0x1e8] sm:$0xff]
    %v87 = vld [vmem:[#allocation2 + $0x1f0] sm:$0xff]
    %v88 = vld [vmem:[#allocation2 + $0x1f8] sm:$0xff]
    %v89 = vld [vmem:[#allocation2 + $0x200] sm:$0xff]
    %v90 = vld [vmem:[#allocation2 + $0x208] sm:$0xff]
    %v91 = vld [vmem:[#allocation2 + $0x210] sm:$0xff]
    %v92 = vld [vmem:[#allocation2 + $0x218] sm:$0xff]
    %v93 = vld [vmem:[#allocation2 + $0x220] sm:$0xff]
    %v94 = vld [vmem:[#allocation2 + $0x228] sm:$0xff]
    %v95 = vld [vmem:[#allocation2 + $0x230] sm:$0xff]
    %v96 = vld [vmem:[#allocation2 + $0x238] sm:$0xff]
    %v97 = vld [vmem:[#allocation2 + $0x240] sm:$0xff]
    %v98 = vld [vmem:[#allocation2 + $0x248] sm:$0xff]
    %v99 = vld [vmem:[#allocation2 + $0x250] sm:$0xff]
    %v100 = vld [vmem:[#allocation2 + $0x258] sm:$0xff]
    %v101 = vld [vmem:[#allocation2 + $0x260] sm:$0xff]
    %v102 = vld [vmem:[#allocation2 + $0x268] sm:$0xff]
    %v103 = vld [vmem:[#allocation2 + $0x270] sm:$0xff]
    %v104 = vld [vmem:[#allocation2 + $0x278] sm:$0xff]
    %v105 = vld [vmem:[#allocation2 + $0x280] sm:$0xff]
    %v106 = vld [vmem:[#allocation2 + $0x288] sm:$0xff]
    %v107 = vld [vmem:[%s0] sm:$0x3]
    %vm108 = vcmask 64512
    %v110 = vsel %vm108, %v107, 0
    %112 = vmatprep.subr.mxu0 0.0
    %113 = vmatpush1.msra.mxu0 %v106
    %114 = vmatprep.subr.mxu0 0.0
    %115 = vmatpush1.msra.mxu0 0.0
    %116 = vmatprep.subr.mxu0 0.0
    %117 = vmatpush1.msra.mxu0 0.0
    %118 = vmatprep.subr.mxu0 0.0
    %119 = vmatpush1.msra.mxu0 0.0
    %120 = vmatprep.subr.mxu0 0.0
    %121 = vmatpush1.msra.mxu0 0.0
    %122 = vmatprep.subr.mxu0 0.0
    %123 = vmatpush1.msra.mxu0 0.0
    %124 = vmatprep.subr.mxu0 0.0
    %125 = vmatpush1.msra.mxu0 0.0
    %126 = vmatprep.subr.mxu0 0.0
    %127 = vmatpush1.msra.mxu0 0.0
    %128 = vmatprep.subr.mxu0 0.0
    %129 = vmatpush1.msra.mxu0 0.0
    %130 = vmatprep.subr.mxu0 0.0
    %131 = vmatpush1.msra.mxu0 0.0
    %132 = vmatprep.subr.mxu0 0.0
    %133 = vmatpush1.msra.mxu0 0.0
    %134 = vmatprep.subr.mxu0 0.0
    %135 = vmatpush1.msra.mxu0 0.0
    %136 = vmatprep.subr.mxu0 0.0
    %137 = vmatpush1.msra.mxu0 0.0
    %138 = vmatprep.subr.mxu0 0.0
    %139 = vmatpush1.msra.mxu0 0.0
    %140 = vmatprep.subr.mxu0 0.0
    %141 = vmatpush1.msra.mxu0 0.0
    %142 = vmatprep.subr.mxu0 0.0
    %143 = vmatpush1.msra.mxu0 0.0
    %144 = vmatprep.subr.mxu0 0.0
    %145 = vmatpush1.msra.mxu0 0.0
    %146 = vmatprep.subr.mxu0 0.0
    %147 = vmatpush1.msra.mxu0 0.0
    %148 = vmatprep.subr.mxu0 0.0
    %149 = vmatpush1.msra.mxu0 0.0
    %150 = vmatprep.subr.mxu0 0.0
    %151 = vmatpush1.msra.mxu0 0.0
    %152 = vmatprep.subr.mxu0 0.0
    %153 = vmatpush1.msra.mxu0 0.0
    %154 = vmatprep.subr.mxu0 0.0
    %155 = vmatpush1.msra.mxu0 0.0
    %156 = vmatprep.subr.mxu0 0.0
    %157 = vmatpush1.msra.mxu0 0.0
    %158 = vmatprep.subr.mxu0 0.0
    %159 = vmatpush1.msra.mxu0 0.0
    %160 = vmatprep.subr.mxu0 0.0
    %161 = vmatpush1.msra.mxu0 0.0
    %162 = vmatprep.subr.mxu0 0.0
    %163 = vmatpush1.msra.mxu0 0.0
    %164 = vmatprep.subr.mxu0 0.0
    %165 = vmatpush1.msra.mxu0 0.0
    %166 = vmatprep.subr.mxu0 0.0
    %167 = vmatpush1.msra.mxu0 0.0
    %168 = vmatprep.subr.mxu0 0.0
    %169 = vmatpush1.msra.mxu0 0.0
    %170 = vmatprep.subr.mxu0 0.0
    %171 = vmatpush1.msra.mxu0 0.0
    %172 = vmatprep.subr.mxu0 0.0
    %173 = vmatpush1.msra.mxu0 0.0
    %174 = vmatprep.subr.mxu0 0.0
    %175 = vmatpush1.msra.mxu0 0.0
    %176 = vmatprep.mubr.f32.mxu0 0.0
    %177 = vmatmul.mubr.f32.gmra.mrb[0].mxu0 %v110
    %v178 = vpop.f32.mrb[0].mxu0
    %v179 = vadd.f32 0.0, %v178
    %v180 = vpop.f32.mrb[0].mxu0
    %181 = vdwg.mxu0
    %v182 = vand.u32 2147483647, %v179
    %vm183 = vcmp.le.f32.partialorder %v182, 0.7853982
    %vm184 = vcmp.lt.s32.totalorder %v179, 0
    %v185 = vand.u32 %v179, 2139095040
    %v186 = vshrl.u32 %v185, 23
    %v187 = vsub.s32 %v186, 127
    %v188 = vand.u32 2147483647, %v179
    %v189 = vand.u32 %v188, 8388607
    %v190 = vor.u32 %v189, 8388608
    %v191 = vsub.s32 0, %v190
    %v192 = vadd.s32 %v187, 1
    %vm193 = vcmp.gt.s32.totalorder %v192, 0
    %v194 = vsel %vm193, %v192, 0
    %v195 = vshrl.u32 %v194, 5
    %v196 = vand.u32 %v194, 31
    %v197 = vsub.s32 32, %v196
    %v198 = vshrl.u32 683565275, %v197
    %v199 = vshll.u32 683565275, %v196
    %v200 = vshrl.u32 2475754826, %v197
    %v201 = vor.u32 %v199, %v200
    %v202 = vshll.u32 2475754826, %v196
    %v203 = vshrl.u32 2131351028, %v197
    %v204 = vor.u32 %v202, %v203
    %v205 = vshll.u32 2131351028, %v196
    %v206 = vshrl.u32 2102212464, %v197
    %v207 = vor.u32 %v205, %v206
    %v208 = vshll.u32 2102212464, %v196
    %v209 = vshrl.u32 920167782, %v197
    %v210 = vor.u32 %v208, %v209
    %v211 = vshll.u32 920167782, %v196
    %v212 = vshrl.u32 1326507024, %v197
    %v213 = vor.u32 %v211, %v212
    %vm214 = vcmp.lt.s32.totalorder %v195, 1
    %vm215 = vcmp.lt.s32.totalorder %v195, 2
    %vm216 = vcmp.lt.s32.totalorder %v195, 3
    %vm217 = vcmp.lt.s32.totalorder %v195, 4
    %v218 = vsel %vm214, %v198, %v201
    %v219 = vsel %vm217, %v207, 2102212464
    %v220 = vsel %vm216, %v204, %v219
    %v221 = vsel %vm215, %v218, %v220
    %v222 = vsel %vm214, %v201, %v204
    %v223 = vsel %vm217, %v210, 920167782
    %v224 = vsel %vm216, %v207, %v223
    %v225 = vsel %vm215, %v222, %v224
    %v226 = vsel %vm214, %v204, %v207
    %v227 = vsel %vm217, %v213, 1326507024
    %v228 = vsel %vm216, %v210, %v227
    %v229 = vsel %vm215, %v226, %v228
    %v230 = vshll.u32 %v190, 8
    %v231 = vmul.u32.u64.compose %v230, %v229
    %v232 = vextract.low.u32 %v231
    %v233 = vextract.high.u32 %v231
    %v234 = vmul.u32.u64.compose %v230, %v225
    %v235 = vextract.low.u32 %v234
    %v236 = vextract.high.u32 %v234
    %v237 = vmul.u32 %v230, %v221
    %v238 = vadd.s32 %v233, %v235
    %vm239 = vc.u32 %v233, %v235
    %v240 = vadd.s32 %v236, 1
    %v241 = vsel %vm239, %v240, %v236
    %v242 = vadd.s32 %v237, %v241
    %v243 = vadd.s32 %v242, 536870912
    %v244 = vshrl.u32 %v243, 30
    %v245 = vshll.u32 %v244, 30
    %v246 = vsub.s32 %v242, %v245
    %vm247 = vcmp.lt.s32.totalorder %v246, 0
    %v248 = vsub.s32 0, %v246
    %v249 = vsel %vm247, %v248, %v246
    %v250 = vclz %v249
    %v251 = vsub.s32 %v250, 2
    %vm252 = vcmp.gt.s32.totalorder 0, %v251
    %v253 = vsel %vm252, 0, %v251
    %v254 = vsub.s32 32, %v253
    %v255 = vshll.u32 %v246, %v253
    %v256 = vshrl.u32 %v238, %v254
    %v257 = vor.u32 %v255, %v256
    %v258 = vsub.s32 4294967266, %v253
    %v259 = vadd.s32 %v258, 127
    %v260 = vshll.u32 %v259, 23
    %v261 = vor.u32 4788187, %v260
    %v262 = vand.u32 2147483647, %v261
    %v264 = vcvt.s32.f32 %v257
    %v265 = vmul.f32 %v264, %v262
    %v266 = vxor.u32 %v265, 2147483648
    %v267 = vsel %vm184, %v266, %v265
    %v268 = vsub.s32 4, %v244
    %v269 = vsel %vm184, %v268, %v244
    %v270 = vsel %vm183, %v179, %v267
    %v271 = vsel %vm183, 0, %v269
    %v272 = vcosq.f32.pop %v270
    %v273 = vsinq.f32.pop %v270
    %vm274 = vweird.f32 %v179
    %v275 = vadd.s32 %v271, 3
    %v276 = vand.u32 %v275, 3
    %vm277 = vcmp.lt.s32.totalorder %v276, 2
    %vm278 = vcmp.eq.s32.totalorder %v276, 0
    %v279 = vxor.u32 %v273, 2147483648
    %v280 = vsel %vm278, %v272, %v279
    %vm281 = vcmp.eq.s32.totalorder %v276, 2
    %v282 = vxor.u32 %v272, 2147483648
    %v283 = vsel %vm281, %v282, %v273
    %v284 = vsel %vm277, %v280, %v283
    %v285 = vsel %vm274, nan, %v284
    %v286 = vand.u32 2147483647, %v179
    %vm287 = vcmp.le.f32.partialorder %v286, 0.7853982
    %vm288 = vcmp.lt.s32.totalorder %v179, 0
    %v289 = vand.u32 %v179, 2139095040
    %v290 = vshrl.u32 %v289, 23
    %v291 = vsub.s32 %v290, 127
    %v292 = vand.u32 2147483647, %v179
    %v293 = vand.u32 %v292, 8388607
    %v294 = vor.u32 %v293, 8388608
    %v295 = vsub.s32 0, %v294
    %v296 = vadd.s32 %v291, 1
    %vm297 = vcmp.gt.s32.totalorder %v296, 0
    %v298 = vsel %vm297, %v296, 0
    %v299 = vshrl.u32 %v298, 5
    %v300 = vand.u32 %v298, 31
    %v301 = vsub.s32 32, %v300
    %v302 = vshrl.u32 683565275, %v301
    %v303 = vshll.u32 683565275, %v300
    %v304 = vshrl.u32 2475754826, %v301
    %v305 = vor.u32 %v303, %v304
    %v306 = vshll.u32 2475754826, %v300
    %v307 = vshrl.u32 2131351028, %v301
    %v308 = vor.u32 %v306, %v307
    %v309 = vshll.u32 2131351028, %v300
    %v310 = vshrl.u32 2102212464, %v301
    %v311 = vor.u32 %v309, %v310
    %v312 = vshll.u32 2102212464, %v300
    %v313 = vshrl.u32 920167782, %v301
    %v314 = vor.u32 %v312, %v313
    %v315 = vshll.u32 920167782, %v300
    %v316 = vshrl.u32 1326507024, %v301
    %v317 = vor.u32 %v315, %v316
    %vm318 = vcmp.lt.s32.totalorder %v299, 1
    %vm319 = vcmp.lt.s32.totalorder %v299, 2
    %vm320 = vcmp.lt.s32.totalorder %v299, 3
    %vm321 = vcmp.lt.s32.totalorder %v299, 4
    %v322 = vsel %vm318, %v302, %v305
    %v323 = vsel %vm321, %v311, 2102212464
    %v324 = vsel %vm320, %v308, %v323
    %v325 = vsel %vm319, %v322, %v324
    %v326 = vsel %vm318, %v305, %v308
    %v327 = vsel %vm321, %v314, 920167782
    %v328 = vsel %vm320, %v311, %v327
    %v329 = vsel %vm319, %v326, %v328
    %v330 = vsel %vm318, %v308, %v311
    %v331 = vsel %vm321, %v317, 1326507024
    %v332 = vsel %vm320, %v314, %v331
    %v333 = vsel %vm319, %v330, %v332
    %v334 = vshll.u32 %v294, 8
    %v335 = vmul.u32.u64.compose %v334, %v333
    %v336 = vextract.low.u32 %v335
    %v337 = vextract.high.u32 %v335
    %v338 = vmul.u32.u64.compose %v334, %v329
    %v339 = vextract.low.u32 %v338
    %v340 = vextract.high.u32 %v338
    %v341 = vmul.u32 %v334, %v325
    %v342 = vadd.s32 %v337, %v339
    %vm343 = vc.u32 %v337, %v339
    %v344 = vadd.s32 %v340, 1
    %v345 = vsel %vm343, %v344, %v340
    %v346 = vadd.s32 %v341, %v345
    %v347 = vadd.s32 %v346, 536870912
    %v348 = vshrl.u32 %v347, 30
    %v349 = vshll.u32 %v348, 30
    %v350 = vsub.s32 %v346, %v349
    %vm351 = vcmp.lt.s32.totalorder %v350, 0
    %v352 = vsub.s32 0, %v350
    %v353 = vsel %vm351, %v352, %v350
    %v354 = vclz %v353
    %v355 = vsub.s32 %v354, 2
    %vm356 = vcmp.gt.s32.totalorder 0, %v355
    %v357 = vsel %vm356, 0, %v355
    %v358 = vsub.s32 32, %v357
    %v359 = vshll.u32 %v350, %v357
    %v360 = vshrl.u32 %v342, %v358
    %v361 = vor.u32 %v359, %v360
    %v362 = vsub.s32 4294967266, %v357
    %v363 = vadd.s32 %v362, 127
    %v364 = vshll.u32 %v363, 23
    %v365 = vor.u32 4788187, %v364
    %v366 = vand.u32 2147483647, %v365
    %v368 = vcvt.s32.f32 %v361
    %v369 = vmul.f32 %v368, %v366
    %v370 = vxor.u32 %v369, 2147483648
    %v371 = vsel %vm288, %v370, %v369
    %v372 = vsub.s32 4, %v348
    %v373 = vsel %vm288, %v372, %v348
    %v374 = vsel %vm287, %v179, %v371
    %v375 = vsel %vm287, 0, %v373
    %v376 = vcosq.f32.pop %v374
    %v377 = vsinq.f32.pop %v374
    %vm378 = vweird.f32 %v179
    %v379 = vand.u32 %v375, 3
    %vm380 = vcmp.lt.s32.totalorder %v379, 2
    %vm381 = vcmp.eq.s32.totalorder %v379, 0
    %v382 = vxor.u32 %v377, 2147483648
    %v383 = vsel %vm381, %v376, %v382
    %vm384 = vcmp.eq.s32.totalorder %v379, 2
    %v385 = vxor.u32 %v376, 2147483648
    %v386 = vsel %vm384, %v385, %v377
    %v387 = vsel %vm380, %v383, %v386
    %v388 = vsel %vm378, nan, %v387
    %389 = vmatprep.subr.mxu0 0.0
    %390 = vmatpush1.msra.mxu0 %v41
    %391 = vmatprep.subr.mxu0 0.0
    %392 = vmatpush1.msra.mxu0 %v42
    %393 = vmatprep.subr.mxu0 0.0
    %394 = vmatpush1.msra.mxu0 %v43
    %395 = vmatprep.subr.mxu0 0.0
    %396 = vmatpush1.msra.mxu0 %v44
    %397 = vmatprep.subr.mxu0 0.0
    %398 = vmatpush1.msra.mxu0 %v45
    %399 = vmatprep.subr.mxu0 0.0
    %400 = vmatpush1.msra.mxu0 %v46
    %401 = vmatprep.subr.mxu0 0.0
    %402 = vmatpush1.msra.mxu0 %v47
    %403 = vmatprep.subr.mxu0 0.0
    %404 = vmatpush1.msra.mxu0 %v48
    %405 = vmatprep.subr.mxu0 0.0
    %406 = vmatpush1.msra.mxu0 %v49
    %407 = vmatprep.subr.mxu0 0.0
    %408 = vmatpush1.msra.mxu0 %v50
    %409 = vmatprep.subr.mxu0 0.0
    %410 = vmatpush1.msra.mxu0 %v51
    %411 = vmatprep.subr.mxu0 0.0
    %412 = vmatpush1.msra.mxu0 %v52
    %413 = vmatprep.subr.mxu0 0.0
    %414 = vmatpush1.msra.mxu0 %v53
    %415 = vmatprep.subr.mxu0 0.0
    %416 = vmatpush1.msra.mxu0 %v54
    %417 = vmatprep.subr.mxu0 0.0
    %418 = vmatpush1.msra.mxu0 %v55
    %419 = vmatprep.subr.mxu0 0.0
    %420 = vmatpush1.msra.mxu0 %v56
    %421 = vmatprep.subr.mxu0 0.0
    %422 = vmatpush1.msra.mxu0 0.0
    %423 = vmatprep.subr.mxu0 0.0
    %424 = vmatpush1.msra.mxu0 0.0
    %425 = vmatprep.subr.mxu0 0.0
    %426 = vmatpush1.msra.mxu0 0.0
    %427 = vmatprep.subr.mxu0 0.0
    %428 = vmatpush1.msra.mxu0 0.0
    %429 = vmatprep.subr.mxu0 0.0
    %430 = vmatpush1.msra.mxu0 0.0
    %431 = vmatprep.subr.mxu0 0.0
    %432 = vmatpush1.msra.mxu0 0.0
    %433 = vmatprep.subr.mxu0 0.0
    %434 = vmatpush1.msra.mxu0 0.0
    %435 = vmatprep.subr.mxu0 0.0
    %436 = vmatpush1.msra.mxu0 0.0
    %437 = vmatprep.subr.mxu0 0.0
    %438 = vmatpush1.msra.mxu0 0.0
    %439 = vmatprep.subr.mxu0 0.0
    %440 = vmatpush1.msra.mxu0 0.0
    %441 = vmatprep.subr.mxu0 0.0
    %442 = vmatpush1.msra.mxu0 0.0
    %443 = vmatprep.subr.mxu0 0.0
    %444 = vmatpush1.msra.mxu0 0.0
    %445 = vmatprep.subr.mxu0 0.0
    %446 = vmatpush1.msra.mxu0 0.0
    %447 = vmatprep.subr.mxu0 0.0
    %448 = vmatpush1.msra.mxu0 0.0
    %449 = vmatprep.subr.mxu0 0.0
    %450 = vmatpush1.msra.mxu0 0.0
    %451 = vmatprep.subr.mxu0 0.0
    %452 = vmatpush1.msra.mxu0 0.0
    %453 = vmatprep.mubr.f32.mxu0 0.0
    %454 = vmatmul.mubr.f32.gmra.mrb[0].mxu0 %v388
    %v455 = vpop.f32.mrb[0].mxu0
    %v456 = vadd.f32 0.0, %v455
    %v457 = vpop.f32.mrb[0].mxu0
    %458 = vdwg.mxu0
    %459 = vmatprep.subr.mxu0 0.0
    %460 = vmatpush1.msra.mxu0 %v25
    %461 = vmatprep.subr.mxu0 0.0
    %462 = vmatpush1.msra.mxu0 %v26
    %463 = vmatprep.subr.mxu0 0.0
    %464 = vmatpush1.msra.mxu0 %v27
    %465 = vmatprep.subr.mxu0 0.0
    %466 = vmatpush1.msra.mxu0 %v28
    %467 = vmatprep.subr.mxu0 0.0
    %468 = vmatpush1.msra.mxu0 %v29
    %469 = vmatprep.subr.mxu0 0.0
    %470 = vmatpush1.msra.mxu0 %v30
    %471 = vmatprep.subr.mxu0 0.0
    %472 = vmatpush1.msra.mxu0 %v31
    %473 = vmatprep.subr.mxu0 0.0
    %474 = vmatpush1.msra.mxu0 %v32
    %475 = vmatprep.subr.mxu0 0.0
    %476 = vmatpush1.msra.mxu0 %v33
    %477 = vmatprep.subr.mxu0 0.0
    %478 = vmatpush1.msra.mxu0 %v34
    %479 = vmatprep.subr.mxu0 0.0
    %480 = vmatpush1.msra.mxu0 %v35
    %481 = vmatprep.subr.mxu0 0.0
    %482 = vmatpush1.msra.mxu0 %v36
    %483 = vmatprep.subr.mxu0 0.0
    %484 = vmatpush1.msra.mxu0 %v37
    %485 = vmatprep.subr.mxu0 0.0
    %486 = vmatpush1.msra.mxu0 %v38
    %487 = vmatprep.subr.mxu0 0.0
    %488 = vmatpush1.msra.mxu0 %v39
    %489 = vmatprep.subr.mxu0 0.0
    %490 = vmatpush1.msra.mxu0 %v40
    %491 = vmatprep.subr.mxu0 0.0
    %492 = vmatpush1.msra.mxu0 0.0
    %493 = vmatprep.subr.mxu0 0.0
    %494 = vmatpush1.msra.mxu0 0.0
    %495 = vmatprep.subr.mxu0 0.0
    %496 = vmatpush1.msra.mxu0 0.0
    %497 = vmatprep.subr.mxu0 0.0
    %498 = vmatpush1.msra.mxu0 0.0
    %499 = vmatprep.subr.mxu0 0.0
    %500 = vmatpush1.msra.mxu0 0.0
    %501 = vmatprep.subr.mxu0 0.0
    %502 = vmatpush1.msra.mxu0 0.0
    %503 = vmatprep.subr.mxu0 0.0
    %504 = vmatpush1.msra.mxu0 0.0
    %505 = vmatprep.subr.mxu0 0.0
    %506 = vmatpush1.msra.mxu0 0.0
    %507 = vmatprep.subr.mxu0 0.0
    %508 = vmatpush1.msra.mxu0 0.0
    %509 = vmatprep.subr.mxu0 0.0
    %510 = vmatpush1.msra.mxu0 0.0
    %511 = vmatprep.subr.mxu0 0.0
    %512 = vmatpush1.msra.mxu0 0.0
    %513 = vmatprep.subr.mxu0 0.0
    %514 = vmatpush1.msra.mxu0 0.0
    %515 = vmatprep.subr.mxu0 0.0
    %516 = vmatpush1.msra.mxu0 0.0
    %517 = vmatprep.subr.mxu0 0.0
    %518 = vmatpush1.msra.mxu0 0.0
    %519 = vmatprep.subr.mxu0 0.0
    %520 = vmatpush1.msra.mxu0 0.0
    %521 = vmatprep.subr.mxu0 0.0
    %522 = vmatpush1.msra.mxu0 0.0
    %523 = vmatprep.mubr.f32.mxu0 0.0
    %524 = vmatmul.mubr.f32.gmra.mrb[0].mxu0 %v285
    %v525 = vpop.f32.mrb[0].mxu0
    %v526 = vadd.f32 %v456, %v525
    %v527 = vpop.f32.mrb[0].mxu0
    %528 = vdwg.mxu0
    %v529 = vlaneseq
    %v530 = vshrl.u32 %v529, 7
    %v531 = vsub.s32 0, %v530
    %v532 = vrot.slane %v105, %v531
    %v533 = vadd.f32 %v526, %v532
    %v534 = vxor.u32 %v533, 2147483648
    %v535 = vmul.f32 %v534, 1.442695
    %v536 = vpow.pop %v535
    %v537 = vadd.f32 %v536, 1.0
    %v538 = vrcp.pop %v537
    %v539 = vmul.f32 1.0, %v538
    %v540 = vmul.f32 %v533, %v539
    %v541 = vlaneseq
    %v542 = vshrl.u32 %v541, 7
    %v543 = vsub.s32 1, %v542
    %v544 = vrot.slane %v105, %v543
    %545 = vmatprep.subr.mxu0 0.0
    %546 = vmatpush1.msra.mxu0 %v57
    %547 = vmatprep.subr.mxu0 0.0
    %548 = vmatpush1.msra.mxu0 %v58
    %549 = vmatprep.subr.mxu0 0.0
    %550 = vmatpush1.msra.mxu0 %v59
    %551 = vmatprep.subr.mxu0 0.0
    %552 = vmatpush1.msra.mxu0 %v60
    %553 = vmatprep.subr.mxu0 0.0
    %554 = vmatpush1.msra.mxu0 %v61
    %555 = vmatprep.subr.mxu0 0.0
    %556 = vmatpush1.msra.mxu0 %v62
    %557 = vmatprep.subr.mxu0 0.0
    %558 = vmatpush1.msra.mxu0 %v63
    %559 = vmatprep.subr.mxu0 0.0
    %560 = vmatpush1.msra.mxu0 %v64
    %561 = vmatprep.subr.mxu0 0.0
    %562 = vmatpush1.msra.mxu0 %v65
    %563 = vmatprep.subr.mxu0 0.0
    %564 = vmatpush1.msra.mxu0 %v66
    %565 = vmatprep.subr.mxu0 0.0
    %566 = vmatpush1.msra.mxu0 %v67
    %567 = vmatprep.subr.mxu0 0.0
    %568 = vmatpush1.msra.mxu0 %v68
    %569 = vmatprep.subr.mxu0 0.0
    %570 = vmatpush1.msra.mxu0 %v69
    %571 = vmatprep.subr.mxu0 0.0
    %572 = vmatpush1.msra.mxu0 %v70
    %573 = vmatprep.subr.mxu0 0.0
    %574 = vmatpush1.msra.mxu0 %v71
    %575 = vmatprep.subr.mxu0 0.0
    %576 = vmatpush1.msra.mxu0 %v72
    %577 = vmatprep.subr.mxu0 0.0
    %578 = vmatpush1.msra.mxu0 0.0
    %579 = vmatprep.subr.mxu0 0.0
    %580 = vmatpush1.msra.mxu0 0.0
    %581 = vmatprep.subr.mxu0 0.0
    %582 = vmatpush1.msra.mxu0 0.0
    %583 = vmatprep.subr.mxu0 0.0
    %584 = vmatpush1.msra.mxu0 0.0
    %585 = vmatprep.subr.mxu0 0.0
    %586 = vmatpush1.msra.mxu0 0.0
    %587 = vmatprep.subr.mxu0 0.0
    %588 = vmatpush1.msra.mxu0 0.0
    %589 = vmatprep.subr.mxu0 0.0
    %590 = vmatpush1.msra.mxu0 0.0
    %591 = vmatprep.subr.mxu0 0.0
    %592 = vmatpush1.msra.mxu0 0.0
    %593 = vmatprep.subr.mxu0 0.0
    %594 = vmatpush1.msra.mxu0 0.0
    %595 = vmatprep.subr.mxu0 0.0
    %596 = vmatpush1.msra.mxu0 0.0
    %597 = vmatprep.subr.mxu0 0.0
    %598 = vmatpush1.msra.mxu0 0.0
    %599 = vmatprep.subr.mxu0 0.0
    %600 = vmatpush1.msra.mxu0 0.0
    %601 = vmatprep.subr.mxu0 0.0
    %602 = vmatpush1.msra.mxu0 0.0
    %603 = vmatprep.subr.mxu0 0.0
    %604 = vmatpush1.msra.mxu0 0.0
    %605 = vmatprep.subr.mxu0 0.0
    %606 = vmatpush1.msra.mxu0 0.0
    %607 = vmatprep.subr.mxu0 0.0
    %608 = vmatpush1.msra.mxu0 0.0
    %609 = vmatprep.mubr.f32.mxu0 0.0
    %610 = vmatmul.mubr.f32.gmra.mrb[0].mxu0 %v540
    %v611 = vpop.f32.mrb[0].mxu0
    %v612 = vadd.f32 %v544, %v611
    %v613 = vpop.f32.mrb[0].mxu0
    %614 = vdwg.mxu0
    %v615 = vlaneseq
    %v616 = vshrl.u32 %v615, 7
    %v617 = vsub.s32 2, %v616
    %v618 = vrot.slane %v105, %v617
    %619 = vmatprep.subr.mxu0 0.0
    %620 = vmatpush1.msra.mxu0 %v73
    %621 = vmatprep.subr.mxu0 0.0
    %622 = vmatpush1.msra.mxu0 %v74
    %623 = vmatprep.subr.mxu0 0.0
    %624 = vmatpush1.msra.mxu0 %v75
    %625 = vmatprep.subr.mxu0 0.0
    %626 = vmatpush1.msra.mxu0 %v76
    %627 = vmatprep.subr.mxu0 0.0
    %628 = vmatpush1.msra.mxu0 %v77
    %629 = vmatprep.subr.mxu0 0.0
    %630 = vmatpush1.msra.mxu0 %v78
    %631 = vmatprep.subr.mxu0 0.0
    %632 = vmatpush1.msra.mxu0 %v79
    %633 = vmatprep.subr.mxu0 0.0
    %634 = vmatpush1.msra.mxu0 %v80
    %635 = vmatprep.subr.mxu0 0.0
    %636 = vmatpush1.msra.mxu0 %v81
    %637 = vmatprep.subr.mxu0 0.0
    %638 = vmatpush1.msra.mxu0 %v82
    %639 = vmatprep.subr.mxu0 0.0
    %640 = vmatpush1.msra.mxu0 %v83
    %641 = vmatprep.subr.mxu0 0.0
    %642 = vmatpush1.msra.mxu0 %v84
    %643 = vmatprep.subr.mxu0 0.0
    %644 = vmatpush1.msra.mxu0 %v85
    %645 = vmatprep.subr.mxu0 0.0
    %646 = vmatpush1.msra.mxu0 %v86
    %647 = vmatprep.subr.mxu0 0.0
    %648 = vmatpush1.msra.mxu0 %v87
    %649 = vmatprep.subr.mxu0 0.0
    %650 = vmatpush1.msra.mxu0 %v88
    %651 = vmatprep.subr.mxu0 0.0
    %652 = vmatpush1.msra.mxu0 0.0
    %653 = vmatprep.subr.mxu0 0.0
    %654 = vmatpush1.msra.mxu0 0.0
    %655 = vmatprep.subr.mxu0 0.0
    %656 = vmatpush1.msra.mxu0 0.0
    %657 = vmatprep.subr.mxu0 0.0
    %658 = vmatpush1.msra.mxu0 0.0
    %659 = vmatprep.subr.mxu0 0.0
    %660 = vmatpush1.msra.mxu0 0.0
    %661 = vmatprep.subr.mxu0 0.0
    %662 = vmatpush1.msra.mxu0 0.0
    %663 = vmatprep.subr.mxu0 0.0
    %664 = vmatpush1.msra.mxu0 0.0
    %665 = vmatprep.subr.mxu0 0.0
    %666 = vmatpush1.msra.mxu0 0.0
    %667 = vmatprep.subr.mxu0 0.0
    %668 = vmatpush1.msra.mxu0 0.0
    %669 = vmatprep.subr.mxu0 0.0
    %670 = vmatpush1.msra.mxu0 0.0
    %671 = vmatprep.subr.mxu0 0.0
    %672 = vmatpush1.msra.mxu0 0.0
    %673 = vmatprep.subr.mxu0 0.0
    %674 = vmatpush1.msra.mxu0 0.0
    %675 = vmatprep.subr.mxu0 0.0
    %676 = vmatpush1.msra.mxu0 0.0
    %677 = vmatprep.subr.mxu0 0.0
    %678 = vmatpush1.msra.mxu0 0.0
    %679 = vmatprep.subr.mxu0 0.0
    %680 = vmatpush1.msra.mxu0 0.0
    %681 = vmatprep.subr.mxu0 0.0
    %682 = vmatpush1.msra.mxu0 0.0
    %683 = vmatprep.mubr.f32.mxu0 0.0
    %684 = vmatmul.mubr.f32.gmra.mrb[0].mxu0 %v612
    %v685 = vpop.f32.mrb[0].mxu0
    %v686 = vadd.f32 %v618, %v685
    %v687 = vpop.f32.mrb[0].mxu0
    %688 = vdwg.mxu0
    %v689 = vxor.u32 %v686, 2147483648
    %v690 = vmul.f32 %v689, 1.442695
    %v691 = vpow.pop %v690
    %v692 = vadd.f32 %v691, 1.0
    %v693 = vrcp.pop %v692
    %v694 = vmul.f32 1.0, %v693
    %v695 = vmul.f32 %v686, %v694
    %v696 = vlaneseq
    %v697 = vshrl.u32 %v696, 7
    %v698 = vsub.s32 3, %v697
    %v699 = vrot.slane %v105, %v698
    %700 = vmatprep.subr.mxu0 0.0
    %701 = vmatpush1.msra.mxu0 %v89
    %702 = vmatprep.subr.mxu0 0.0
    %703 = vmatpush1.msra.mxu0 %v90
    %704 = vmatprep.subr.mxu0 0.0
    %705 = vmatpush1.msra.mxu0 %v91
    %706 = vmatprep.subr.mxu0 0.0
    %707 = vmatpush1.msra.mxu0 %v92
    %708 = vmatprep.subr.mxu0 0.0
    %709 = vmatpush1.msra.mxu0 %v93
    %710 = vmatprep.subr.mxu0 0.0
    %711 = vmatpush1.msra.mxu0 %v94
    %712 = vmatprep.subr.mxu0 0.0
    %713 = vmatpush1.msra.mxu0 %v95
    %714 = vmatprep.subr.mxu0 0.0
    %715 = vmatpush1.msra.mxu0 %v96
    %716 = vmatprep.subr.mxu0 0.0
    %717 = vmatpush1.msra.mxu0 %v97
    %718 = vmatprep.subr.mxu0 0.0
    %719 = vmatpush1.msra.mxu0 %v98
    %720 = vmatprep.subr.mxu0 0.0
    %721 = vmatpush1.msra.mxu0 %v99
    %722 = vmatprep.subr.mxu0 0.0
    %723 = vmatpush1.msra.mxu0 %v100
    %724 = vmatprep.subr.mxu0 0.0
    %725 = vmatpush1.msra.mxu0 %v101
    %726 = vmatprep.subr.mxu0 0.0
    %727 = vmatpush1.msra.mxu0 %v102
    %728 = vmatprep.subr.mxu0 0.0
    %729 = vmatpush1.msra.mxu0 %v103
    %730 = vmatprep.subr.mxu0 0.0
    %731 = vmatpush1.msra.mxu0 %v104
    %732 = vmatprep.subr.mxu0 0.0
    %733 = vmatpush1.msra.mxu0 0.0
    %734 = vmatprep.subr.mxu0 0.0
    %735 = vmatpush1.msra.mxu0 0.0
    %736 = vmatprep.subr.mxu0 0.0
    %737 = vmatpush1.msra.mxu0 0.0
    %738 = vmatprep.subr.mxu0 0.0
    %739 = vmatpush1.msra.mxu0 0.0
    %740 = vmatprep.subr.mxu0 0.0
    %741 = vmatpush1.msra.mxu0 0.0
    %742 = vmatprep.subr.mxu0 0.0
    %743 = vmatpush1.msra.mxu0 0.0
    %744 = vmatprep.subr.mxu0 0.0
    %745 = vmatpush1.msra.mxu0 0.0
    %746 = vmatprep.subr.mxu0 0.0
    %747 = vmatpush1.msra.mxu0 0.0
    %748 = vmatprep.subr.mxu0 0.0
    %749 = vmatpush1.msra.mxu0 0.0
    %750 = vmatprep.subr.mxu0 0.0
    %751 = vmatpush1.msra.mxu0 0.0
    %752 = vmatprep.subr.mxu0 0.0
    %753 = vmatpush1.msra.mxu0 0.0
    %754 = vmatprep.subr.mxu0 0.0
    %755 = vmatpush1.msra.mxu0 0.0
    %756 = vmatprep.subr.mxu0 0.0
    %757 = vmatpush1.msra.mxu0 0.0
    %758 = vmatprep.subr.mxu0 0.0
    %759 = vmatpush1.msra.mxu0 0.0
    %760 = vmatprep.subr.mxu0 0.0
    %761 = vmatpush1.msra.mxu0 0.0
    %762 = vmatprep.subr.mxu0 0.0
    %763 = vmatpush1.msra.mxu0 0.0
    %764 = vmatprep.mubr.f32.mxu0 0.0
    %765 = vmatmul.mubr.f32.gmra.mrb[0].mxu0 %v695
    %v766 = vpop.f32.mrb[0].mxu0
    %v767 = vadd.f32 %v699, %v766
    %v768 = vpop.f32.mrb[0].mxu0
    %769 = vdwg.mxu0
    %v770 = vmax.f32 %v767, 0.0
    %v771 = vand.u32 2147483647, %v767
    %v772 = vsub.f32 0.0, %v771
    %v773 = vmul.f32 %v772, 1.442695
    %v774 = vpow.pop %v773
    %v775 = vadd.f32 %v774, 1.0
    %v776 = vlog2.pop %v775
    %v777 = vmul.f32 %v776, 0.6931472
    %v778 = vmul.f32 -0.5, %v774
    %v779 = vadd.f32 %v778, 1.0
    %v780 = vmul.f32 %v779, %v774
    %v781 = vand.u32 2147483647, %v774
    %vm782 = vcmp.lt.f32.partialorder %v781, 0.0004427343
    %v783 = vsel %vm782, %v780, %v777
    %v784 = vadd.f32 %v770, %v783
    %v785 = vadd.f32 %v784, 1e-06
    %vm786 = vcmp.gt.f32.partialorder %v105, 0.5
    %v787 = vsel %vm786, 1, 0
    %v788 = vlaneseq
    %v789 = vshrl.u32 %v788, 7
    %v790 = vsub.s32 4, %v789
    %v791 = vrot.slane %v787, %v790
    %vm792 = vcmp.eq.s32.totalorder %v791, 1
    %v793 = vsel %vm792, %v785, %v767
    %794 = vst [vmem:[%s2] sm:$0x3] %v793
    // Predicated region
    $region14: #{stat_predictor.1} parent=1 // pred_check
      _
    $region15: #{stat_predictor.1} parent=1 // pred_check_branch
      %796 = sbr.rel (0) target = $region17
    $region16: #{stat_predictor.1} parent=1 // pred_region
      _
    $region17: #{stat_predictor.1} parent=1 // pred_fallthru
      _
    // Predicated region
    $region18: #{stat_predictor.1} parent=1 // pred_check
      _
    $region19: #{stat_predictor.1} parent=1 // pred_check_branch
      %798 = sbr.rel (0) target = $region21
    $region20: #{stat_predictor.1} parent=1 // pred_region
      _
    $region21: #{stat_predictor.1} parent=1 // pred_fallthru
      _
    %799 = vsyncpa [#allocation3], 1

</llo_original>
